<compile_context>
chip_gen: v7x
topology: tpu7x:2x2x1
jax: 0.10.0
libtpu: 0.0.40
codegen_flags: <defaults>
</compile_context>

<pallas_src>
import jax
import jax.numpy as jnp
from jax.experimental import pallas as pl
from jax.experimental.pallas import tpu as pltpu

CIN = 24
H = W = 7          # AvgPool2d((7,7)) + the `x * inputs` broadcast force a 7x7 map
HW = H * W


def _global_attention_kernel(x_ref, w1_ref, b1_ref, w2_ref, b2_ref, out_ref):
    # x_ref / out_ref: (B_TILE, CIN, HW);  w1/w2: (CIN, CIN);  b1/b2: (CIN, 1)
    b_tile = x_ref.shape[0]

    # Selection matrices (built in-kernel, ~1.4 KB each, no HBM traffic):
    #   pool_w[hw, h] = 1/W  iff hw // W == h   -> mean over the W axis
    #   expand[h, hw] = 1.0  iff hw // W == h   -> broadcast that mean back over W
    hw_r = jax.lax.broadcasted_iota(jnp.int32, (HW, H), 0)
    h_c = jax.lax.broadcasted_iota(jnp.int32, (HW, H), 1)
    pool_w = ((hw_r >= h_c * W) & (hw_r < (h_c + 1) * W)).astype(jnp.float32) * (1.0 / W)

    h_r = jax.lax.broadcasted_iota(jnp.int32, (H, HW), 0)
    hw_c = jax.lax.broadcasted_iota(jnp.int32, (H, HW), 1)
    expand = ((hw_c >= h_r * W) & (hw_c < (h_r + 1) * W)).astype(jnp.float32)

    w1 = w1_ref[...]
    b1 = b1_ref[...]
    w2 = w2_ref[...]
    b2 = b2_ref[...]

    for bt in range(b_tile):                      # static unroll; b_tile is small
        xb = x_ref[bt]                            # (CIN, HW)
        # AvgPool2d((7,7)): global mean over the 49 logical lanes
        pooled = jnp.mean(xb, axis=-1, keepdims=True)                     # (CIN, 1)
        # conv1 (1x1) + ReLU, conv2 (1x1) + Sigmoid: channel matmuls
        a1 = jnp.maximum(
            jnp.dot(w1, pooled, preferred_element_type=jnp.float32) + b1, 0.0)
        a2 = jax.nn.sigmoid(
            jnp.dot(w2, a1, preferred_element_type=jnp.float32) + b2)     # (CIN, 1)
        c_a = xb * a2                                                     # channel attention
        # torch.mean(C_A, -1, True): groups of 7 consecutive lanes, via MXU
        m = jnp.dot(c_a, pool_w, preferred_element_type=jnp.float32)      # (CIN, H)
        s = jax.nn.sigmoid(m)
        s_exp = jnp.dot(s, expand, preferred_element_type=jnp.float32)    # (CIN, HW)
        out_ref[bt] = (s_exp * c_a).astype(out_ref.dtype)                 # S_A


def _pick_b_tile(batch):
    if batch <= 1:
        return 1
    cap = max(1, min(8, batch // 2))              # keep >= 2 grid steps for v7x's 2 TCs
    return max(d for d in range(1, cap + 1) if batch % d == 0)


def global_attention_block(inputs, w1, b1, w2, b2, *, b_tile=None):
    batch, c, h, w = inputs.shape
    assert (c, h, w) == (CIN, H, W), "Global_attention_block requires (B, 24, 7, 7)"
    if b_tile is None:
        b_tile = _pick_b_tile(batch)
    assert batch % b_tile == 0

    x = inputs.reshape(batch, CIN, HW).astype(jnp.float32)
    args = (
        x,
        w1.astype(jnp.float32),
        b1.reshape(CIN, 1).astype(jnp.float32),
        w2.astype(jnp.float32),
        b2.reshape(CIN, 1).astype(jnp.float32),
    )
    out = pl.pallas_call(
        _global_attention_kernel,
        out_shape=jax.ShapeDtypeStruct((batch, CIN, HW), jnp.float32),
        grid=(batch // b_tile,),
        in_specs=[
            pl.BlockSpec((b_tile, CIN, HW), lambda i: (i, 0, 0)),
            pl.BlockSpec((CIN, CIN), lambda i: (0, 0)),
            pl.BlockSpec((CIN, 1), lambda i: (0, 0)),
            pl.BlockSpec((CIN, CIN), lambda i: (0, 0)),
            pl.BlockSpec((CIN, 1), lambda i: (0, 0)),
        ],
        out_specs=pl.BlockSpec((b_tile, CIN, HW), lambda i: (i, 0, 0)),
        compiler_params=pltpu.CompilerParams(dimension_semantics=("parallel",)),
    )(*args)
    return out.reshape(batch, CIN, H, W)


def reference(inputs, w1, b1, w2, b2):
    """Pure-JAX reference mirroring the PyTorch forward exactly."""
    pooled = inputs.mean(axis=(2, 3))                                  # AvgPool2d((7,7))
    a1 = jnp.maximum(pooled @ w1.T + b1, 0.0)                          # conv1 + ReLU
    a2 = jax.nn.sigmoid(a1 @ w2.T + b2)                                # conv2 + Sigmoid
    c_a = a2[:, :, None, None] * inputs                                # C_A
    s = jax.nn.sigmoid(jnp.mean(c_a, axis=-1, keepdims=True))          # mean over W + sigmoid
    return s * c_a                                                     # S_A


if __name__ == "__main__":
    key = jax.random.PRNGKey(0)
    k_in, k_w1, k_b1, k_w2, k_b2 = jax.random.split(key, 5)
    B = 2

    inputs = jax.random.normal(k_in, (B, CIN, H, W), jnp.float32)
    w1 = 0.2 * jax.random.normal(k_w1, (CIN, CIN), jnp.float32)
    b1 = 0.1 * jax.random.normal(k_b1, (CIN,), jnp.float32)
    w2 = 0.2 * jax.random.normal(k_w2, (CIN, CIN), jnp.float32)
    b2 = 0.1 * jax.random.normal(k_b2, (CIN,), jnp.float32)

    out = global_attention_block(inputs, w1, b1, w2, b2)
    out = jax.block_until_ready(out)

    ref = reference(inputs, w1, b1, w2, b2)
    assert out.shape == (B, CIN, H, W)
    if not jnp.allclose(out, ref, atol=1e-4, rtol=1e-4):
        raise AssertionError("Pallas result does not match pure-JAX reference")
    print("KERNEL_OK")
</pallas_src>

<mosaic_0001>
module attributes {stable_mosaic.version = 11 : i64} {
  func.func @_global_attention_kernel(%arg0: i32, %arg1: memref<1x24x49xf32, #tpu.memory_space<vmem>>, %arg2: memref<24x24xf32, #tpu.memory_space<vmem>>, %arg3: memref<24x1xf32, #tpu.memory_space<vmem>>, %arg4: memref<24x24xf32, #tpu.memory_space<vmem>>, %arg5: memref<24x1xf32, #tpu.memory_space<vmem>>, %arg6: memref<1x24x49xf32, #tpu.memory_space<vmem>>) attributes {dimension_semantics = [#tpu.dimension_semantics<parallel>], iteration_bounds = array<i64: 2>, scalar_prefetch = 0 : i64, scratch_operands = 0 : i64, tpu.core_type = #tpu.core_type<tc>, window_params = [{transform_indices = @transform_0, window_bounds = array<i64: 1, 24, 49>}, {pipeline_mode = #tpu.pipeline_mode<synchronous>, transform_indices = @transform_1, window_bounds = array<i64: 24, 24>}, {pipeline_mode = #tpu.pipeline_mode<synchronous>, transform_indices = @transform_2, window_bounds = array<i64: 24, 1>}, {pipeline_mode = #tpu.pipeline_mode<synchronous>, transform_indices = @transform_3, window_bounds = array<i64: 24, 24>}, {pipeline_mode = #tpu.pipeline_mode<synchronous>, transform_indices = @transform_4, window_bounds = array<i64: 24, 1>}, {transform_indices = @transform_5, window_bounds = array<i64: 1, 24, 49>}]} {
    %0 = tpu.iota {dimensions = array<i32: 0>} : vector<49x7xi32>
    %1 = tpu.iota {dimensions = array<i32: 1>} : vector<49x7xi32>
    %c7_i32 = arith.constant 7 : i32
    %2 = vector.broadcast %c7_i32 : i32 to vector<49x7xi32>
    %3 = arith.muli %1, %2 : vector<49x7xi32>
    %4 = arith.cmpi sge, %0, %3 : vector<49x7xi32>
    %c1_i32 = arith.constant 1 : i32
    %5 = vector.broadcast %c1_i32 : i32 to vector<49x7xi32>
    %6 = arith.addi %1, %5 : vector<49x7xi32>
    %c7_i32_0 = arith.constant 7 : i32
    %7 = vector.broadcast %c7_i32_0 : i32 to vector<49x7xi32>
    %8 = arith.muli %6, %7 : vector<49x7xi32>
    %9 = arith.cmpi slt, %0, %8 : vector<49x7xi32>
    %10 = arith.andi %4, %9 : vector<49x7xi1>
    %11 = arith.extui %10 : vector<49x7xi1> to vector<49x7xi32>
    %12 = arith.sitofp %11 : vector<49x7xi32> to vector<49x7xf32>
    %cst = arith.constant 0.142857149 : f32
    %13 = vector.broadcast %cst : f32 to vector<49x7xf32>
    %14 = arith.mulf %12, %13 : vector<49x7xf32>
    %15 = tpu.iota {dimensions = array<i32: 0>} : vector<7x49xi32>
    %16 = tpu.iota {dimensions = array<i32: 1>} : vector<7x49xi32>
    %c7_i32_1 = arith.constant 7 : i32
    %17 = vector.broadcast %c7_i32_1 : i32 to vector<7x49xi32>
    %18 = arith.muli %15, %17 : vector<7x49xi32>
    %19 = arith.cmpi sge, %16, %18 : vector<7x49xi32>
    %c1_i32_2 = arith.constant 1 : i32
    %20 = vector.broadcast %c1_i32_2 : i32 to vector<7x49xi32>
    %21 = arith.addi %15, %20 : vector<7x49xi32>
    %c7_i32_3 = arith.constant 7 : i32
    %22 = vector.broadcast %c7_i32_3 : i32 to vector<7x49xi32>
    %23 = arith.muli %21, %22 : vector<7x49xi32>
    %24 = arith.cmpi slt, %16, %23 : vector<7x49xi32>
    %25 = arith.andi %19, %24 : vector<7x49xi1>
    %26 = arith.extui %25 : vector<7x49xi1> to vector<7x49xi32>
    %27 = arith.sitofp %26 : vector<7x49xi32> to vector<7x49xf32>
    %c0 = arith.constant 0 : index
    %c0_4 = arith.constant 0 : index
    %28 = vector.load %arg2[%c0, %c0_4] : memref<24x24xf32, #tpu.memory_space<vmem>>, vector<24x24xf32>
    %c0_5 = arith.constant 0 : index
    %c0_6 = arith.constant 0 : index
    %29 = vector.load %arg3[%c0_5, %c0_6] : memref<24x1xf32, #tpu.memory_space<vmem>>, vector<24x1xf32>
    %c0_7 = arith.constant 0 : index
    %c0_8 = arith.constant 0 : index
    %30 = vector.load %arg4[%c0_7, %c0_8] : memref<24x24xf32, #tpu.memory_space<vmem>>, vector<24x24xf32>
    %c0_9 = arith.constant 0 : index
    %c0_10 = arith.constant 0 : index
    %31 = vector.load %arg5[%c0_9, %c0_10] : memref<24x1xf32, #tpu.memory_space<vmem>>, vector<24x1xf32>
    %c0_11 = arith.constant 0 : index
    %c0_12 = arith.constant 0 : index
    %c0_13 = arith.constant 0 : index
    %32 = vector.load %arg1[%c0_11, %c0_12, %c0_13] : memref<1x24x49xf32, #tpu.memory_space<vmem>>, vector<1x24x49xf32>
    %33 = vector.shape_cast %32 : vector<1x24x49xf32> to vector<24x49xf32>
    %cst_14 = arith.constant dense<0.000000e+00> : vector<24xf32>
    %34 = vector.multi_reduction <add>, %33, %cst_14 [1] : vector<24x49xf32> to vector<24xf32>
    %35 = vector.shape_cast %34 : vector<24xf32> to vector<24x1xf32>
    %cst_15 = arith.constant 4.900000e+01 : f32
    %36 = vector.broadcast %cst_15 : f32 to vector<24x1xf32>
    %37 = arith.divf %35, %36 : vector<24x1xf32>
    %cst_16 = arith.constant dense<0.000000e+00> : vector<24x1xf32>
    %38 = tpu.matmul %28, %37, %cst_16 {dimension_numbers = #tpu.dot_dimension_numbers<[1], [0], [0], [1], [0, 0, 1, 1], [], []>} : vector<24x24xf32>, vector<24x1xf32>, vector<24x1xf32> -> vector<24x1xf32>
    %39 = arith.addf %38, %29 : vector<24x1xf32>
    %cst_17 = arith.constant 0.000000e+00 : f32
    %40 = vector.broadcast %cst_17 : f32 to vector<24x1xf32>
    %41 = arith.maximumf %39, %40 : vector<24x1xf32>
    %cst_18 = arith.constant dense<0.000000e+00> : vector<24x1xf32>
    %42 = tpu.matmul %30, %41, %cst_18 {dimension_numbers = #tpu.dot_dimension_numbers<[1], [0], [0], [1], [0, 0, 1, 1], [], []>} : vector<24x24xf32>, vector<24x1xf32>, vector<24x1xf32> -> vector<24x1xf32>
    %43 = arith.addf %42, %31 : vector<24x1xf32>
    %44 = arith.negf %43 : vector<24x1xf32>
    %45 = math.exp %44 : vector<24x1xf32>
    %cst_19 = arith.constant 1.000000e+00 : f32
    %46 = vector.broadcast %cst_19 : f32 to vector<24x1xf32>
    %47 = arith.addf %46, %45 : vector<24x1xf32>
    %48 = arith.divf %46, %47 : vector<24x1xf32>
    %49 = vector.broadcast %48 : vector<24x1xf32> to vector<24x49xf32>
    %50 = arith.mulf %33, %49 : vector<24x49xf32>
    %cst_20 = arith.constant dense<0.000000e+00> : vector<24x7xf32>
    %51 = tpu.matmul %50, %14, %cst_20 {dimension_numbers = #tpu.dot_dimension_numbers<[1], [0], [0], [1], [0, 0, 1, 1], [], []>} : vector<24x49xf32>, vector<49x7xf32>, vector<24x7xf32> -> vector<24x7xf32>
    %52 = arith.negf %51 : vector<24x7xf32>
    %53 = math.exp %52 : vector<24x7xf32>
    %cst_21 = arith.constant 1.000000e+00 : f32
    %54 = vector.broadcast %cst_21 : f32 to vector<24x7xf32>
    %55 = arith.addf %54, %53 : vector<24x7xf32>
    %56 = arith.divf %54, %55 : vector<24x7xf32>
    %cst_22 = arith.constant dense<0.000000e+00> : vector<24x49xf32>
    %57 = tpu.matmul %56, %27, %cst_22 {dimension_numbers = #tpu.dot_dimension_numbers<[1], [0], [0], [1], [0, 0, 1, 1], [], []>} : vector<24x7xf32>, vector<7x49xf32>, vector<24x49xf32> -> vector<24x49xf32>
    %58 = arith.mulf %57, %50 : vector<24x49xf32>
    %c0_23 = arith.constant 0 : index
    %c0_24 = arith.constant 0 : index
    %c0_25 = arith.constant 0 : index
    %59 = vector.load %arg6[%c0_23, %c0_24, %c0_25] : memref<1x24x49xf32, #tpu.memory_space<vmem>>, vector<1x24x49xf32>
    %60 = vector.shape_cast %59 : vector<1x24x49xf32> to vector<24x49xf32>
    %61 = vector.shape_cast %58 : vector<24x49xf32> to vector<1x24x49xf32>
    tpu.vector_store %arg6[%c0_23, %c0_24, %c0_25], %61 {strides = array<i32>} : memref<1x24x49xf32, #tpu.memory_space<vmem>>, vector<1x24x49xf32>,
    return
  }
  func.func @transform_0(%arg0: i32) -> (i32, i32, i32) {
    %c0_i32 = arith.constant 0 : i32
    %c0_i32_0 = arith.constant 0 : i32
    %c0_i32_1 = arith.constant 0 : i32
    return %arg0, %c0_i32, %c0_i32_0 : i32, i32, i32
  }
  func.func @transform_1(%arg0: i32) -> (i32, i32) {
    %c0_i32 = arith.constant 0 : i32
    %c0_i32_0 = arith.constant 0 : i32
    %c0_i32_1 = arith.constant 0 : i32
    return %c0_i32, %c0_i32_0 : i32, i32
  }
  func.func @transform_2(%arg0: i32) -> (i32, i32) {
    %c0_i32 = arith.constant 0 : i32
    %c0_i32_0 = arith.constant 0 : i32
    %c0_i32_1 = arith.constant 0 : i32
    return %c0_i32, %c0_i32_0 : i32, i32
  }
  func.func @transform_3(%arg0: i32) -> (i32, i32) {
    %c0_i32 = arith.constant 0 : i32
    %c0_i32_0 = arith.constant 0 : i32
    %c0_i32_1 = arith.constant 0 : i32
    return %c0_i32, %c0_i32_0 : i32, i32
  }
  func.func @transform_4(%arg0: i32) -> (i32, i32) {
    %c0_i32 = arith.constant 0 : i32
    %c0_i32_0 = arith.constant 0 : i32
    %c0_i32_1 = arith.constant 0 : i32
    return %c0_i32, %c0_i32_0 : i32, i32
  }
  func.func @transform_5(%arg0: i32) -> (i32, i32, i32) {
    %c0_i32 = arith.constant 0 : i32
    %c0_i32_0 = arith.constant 0 : i32
    %c0_i32_1 = arith.constant 0 : i32
    return %arg0, %c0_i32, %c0_i32_0 : i32, i32, i32
  }
}

</mosaic_0001>

<llo_original>
// kernel: tpu_custom_call.1
$region0: #{tpu_custom_call.1}
  #allocation0 [shape = 'u32[]', space=smem, size = 0x4, offset = 0x4, fixed_abs, tag = 'smem constant byte address 0x4 - core index']
  #allocation1 [shape = 'u32[144,128]{1,0:T(1,128)}', space=vmem, size = 0x12000, scoped, tag = 'internal scratch']
  %s0 = inlined_call_operand.vmem [shape: f32[2,24,49], index: 0, kind: input, shape index: {}]
  %s1 = inlined_call_operand.hbm [shape: f32[24,24], index: 1, kind: input, shape index: {}]
  %s2 = inlined_call_operand.vmem [shape: f32[24,1], index: 2, kind: input, shape index: {}]
  %s3 = inlined_call_operand.hbm [shape: f32[24,24], index: 3, kind: input, shape index: {}]
  %s4 = inlined_call_operand.vmem [shape: f32[24,1], index: 4, kind: input, shape index: {}]
  %s5 = inlined_call_operand.hbm [shape: f32[2,24,49], index: 5, kind: output, shape index: {}]
  %s6 = sld [smem:[#allocation0]]
  $region61: #{tpu_custom_call.1} parent=0
    _
  %s8 = ssub.s32 1, %s6
  %s9 = scalar_select 0, %s8, %s6
  $region1: #{tpu_custom_call.1} parent=0
    #allocation2 [shape = 'u8[12288]{0}', space=vmem, size = 0x3000, scoped, tag = 'input window, operand 1, single buffered']
    #allocation3 [shape = 's32[2]{0}', space=sflag, size = 0x8, scoped, tag = 'scoped memory for tpu_custom_call.1']
    #allocation4 [shape = 's32[2]{0}', space=sflag, size = 0x8, scoped, tag = 'scoped memory for tpu_custom_call.1']
    #allocation5 [shape = 'u8[12288]{0}', space=vmem, size = 0x3000, scoped, tag = 'input window, operand 3, single buffered']
    #allocation6 [shape = 's32[1]{0}', space=sflag, size = 0x4, scoped, tag = 'scoped memory for tpu_custom_call.1']
    #allocation7 [shape = 'u8[24576]{0}', space=vmem, size = 0x6000, scoped, tag = 'output window, operand 0']
    %10 = vsyncpa [#allocation3], 0
    %11 = vsyncpa [#allocation6], 0
    %12 = vsyncpa [#allocation4], 0
    %s13 = scalar_lea.sflag [#allocation4], 1
    %14 = vsyncpa %s13, 0
    loop: start=0, step=1, limit=4
    $region2: #{tpu_custom_call.1} parent=1 // loop_pre_header
      _
    $region3: #{tpu_custom_call.1} parent=1 // loop_header
      %s16 = sphi 0, %s20
      %p17 = scmp.ge.s32.totalorder %s16, 4
      %s26 = sphi 0, %s28
      %s29 = sphi 0, %s26
      %s30 = sphi 0, %s29
      %s46 = sphi 0, %s30
      %s50 = sphi 0, %s50
      %s52 = sphi 0, %s50
      %s53 = sphi 0, %s52
      %s67 = sphi 0, %s53
      %s71 = sphi 0, %s71
      %s73 = sphi 0, %s71
      %s74 = sphi 0, %s73
      %s88 = sphi 0, %s74
      %s92 = sphi 0, %s92
      %s94 = sphi 0, %s92
      %s95 = sphi 0, %s94
      %s109 = sphi 0, %s95
      %s113 = sphi 0, %s113
      %s115 = sphi 0, %s113
      %s116 = sphi 0, %s115
      %s130 = sphi 0, %s116
      %s136 = sphi 0, %s138
      %s139 = sphi 0, %s136
      %s140 = sphi 0, %s139
      %s156 = sphi 0, %s140
    $region4: #{tpu_custom_call.1} parent=1 // loop_header_branch
      %19 = sbr.rel (%p17) target = $region8
    $region5: #{tpu_custom_call.1} parent=1 // loop_body
      %s21 = ssub.s32 %s16, 1
      %s22 = ssub.s32 %s16, 2
      %s23 = sadd.s32 %s16, 1
      %s24 = ssub.s32 %s16, %s23
      %p25 = scmp.eq.s32.totalorder %s24, 0
      %s27 = sadd.s32 %s26, 1
      %s28 = scalar_select %p25, %s26, %s27
      %p31 = pneg %p25
      %p32 = scmp.eq.s32.totalorder %s16, 1
      %p33 = por %p31, %p32
      %p34 = scmp.ne.s32.totalorder %s26, %s29
      %p35 = scmp.eq.s32.totalorder %s16, 0
      %p36 = por %p34, %p35
      %p37 = scmp.ne.s32.totalorder %s26, %s29
      %p38 = scmp.eq.s32.totalorder %s21, 1
      %p39 = por %p37, %p38
      %p40 = scmp.ne.s32.totalorder %s29, %s30
      %p41 = scmp.eq.s32.totalorder %s21, 0
      %p42 = por %p40, %p41
      %p43 = scmp.ne.s32.totalorder %s29, %s30
      %p44 = scmp.eq.s32.totalorder %s22, 1
      %p45 = por %p43, %p44
      %p47 = scmp.ne.s32.totalorder %s30, %s46
      %p48 = scmp.eq.s32.totalorder %s22, 0
      %p49 = por %p47, %p48
      %s51 = sadd.s32 %s50, 1
      %p54 = scmp.eq.s32.totalorder %s16, 1
      %p55 = scmp.ne.s32.totalorder %s50, %s52
      %p56 = scmp.eq.s32.totalorder %s16, 0
      %p57 = por %p55, %p56
      %p58 = scmp.ne.s32.totalorder %s50, %s52
      %p59 = scmp.eq.s32.totalorder %s21, 1
      %p60 = por %p58, %p59
      %p61 = scmp.ne.s32.totalorder %s52, %s53
      %p62 = scmp.eq.s32.totalorder %s21, 0
      %p63 = por %p61, %p62
      %p64 = scmp.ne.s32.totalorder %s52, %s53
      %p65 = scmp.eq.s32.totalorder %s22, 1
      %p66 = por %p64, %p65
      %p68 = scmp.ne.s32.totalorder %s53, %s67
      %p69 = scmp.eq.s32.totalorder %s22, 0
      %p70 = por %p68, %p69
      %s72 = sadd.s32 %s71, 1
      %p75 = scmp.eq.s32.totalorder %s16, 1
      %p76 = scmp.ne.s32.totalorder %s71, %s73
      %p77 = scmp.eq.s32.totalorder %s16, 0
      %p78 = por %p76, %p77
      %p79 = scmp.ne.s32.totalorder %s71, %s73
      %p80 = scmp.eq.s32.totalorder %s21, 1
      %p81 = por %p79, %p80
      %p82 = scmp.ne.s32.totalorder %s73, %s74
      %p83 = scmp.eq.s32.totalorder %s21, 0
      %p84 = por %p82, %p83
      %p85 = scmp.ne.s32.totalorder %s73, %s74
      %p86 = scmp.eq.s32.totalorder %s22, 1
      %p87 = por %p85, %p86
      %p89 = scmp.ne.s32.totalorder %s74, %s88
      %p90 = scmp.eq.s32.totalorder %s22, 0
      %p91 = por %p89, %p90
      %s93 = sadd.s32 %s92, 1
      %p96 = scmp.eq.s32.totalorder %s16, 1
      %p97 = scmp.ne.s32.totalorder %s92, %s94
      %p98 = scmp.eq.s32.totalorder %s16, 0
      %p99 = por %p97, %p98
      %p100 = scmp.ne.s32.totalorder %s92, %s94
      %p101 = scmp.eq.s32.totalorder %s21, 1
      %p102 = por %p100, %p101
      %p103 = scmp.ne.s32.totalorder %s94, %s95
      %p104 = scmp.eq.s32.totalorder %s21, 0
      %p105 = por %p103, %p104
      %p106 = scmp.ne.s32.totalorder %s94, %s95
      %p107 = scmp.eq.s32.totalorder %s22, 1
      %p108 = por %p106, %p107
      %p110 = scmp.ne.s32.totalorder %s95, %s109
      %p111 = scmp.eq.s32.totalorder %s22, 0
      %p112 = por %p110, %p111
      %s114 = sadd.s32 %s113, 1
      %p117 = scmp.eq.s32.totalorder %s16, 1
      %p118 = scmp.ne.s32.totalorder %s113, %s115
      %p119 = scmp.eq.s32.totalorder %s16, 0
      %p120 = por %p118, %p119
      %p121 = scmp.ne.s32.totalorder %s113, %s115
      %p122 = scmp.eq.s32.totalorder %s21, 1
      %p123 = por %p121, %p122
      %p124 = scmp.ne.s32.totalorder %s115, %s116
      %p125 = scmp.eq.s32.totalorder %s21, 0
      %p126 = por %p124, %p125
      %p127 = scmp.ne.s32.totalorder %s115, %s116
      %p128 = scmp.eq.s32.totalorder %s22, 1
      %p129 = por %p127, %p128
      %p131 = scmp.ne.s32.totalorder %s116, %s130
      %p132 = scmp.eq.s32.totalorder %s22, 0
      %p133 = por %p131, %p132
      %s134 = ssub.s32 %s16, %s23
      %p135 = scmp.eq.s32.totalorder %s134, 0
      %s137 = sadd.s32 %s136, 1
      %s138 = scalar_select %p135, %s136, %s137
      %p141 = pneg %p135
      %p142 = scmp.eq.s32.totalorder %s16, 1
      %p143 = por %p141, %p142
      %p144 = scmp.ne.s32.totalorder %s136, %s139
      %p145 = scmp.eq.s32.totalorder %s16, 0
      %p146 = por %p144, %p145
      %p147 = scmp.ne.s32.totalorder %s136, %s139
      %p148 = scmp.eq.s32.totalorder %s21, 1
      %p149 = por %p147, %p148
      %p150 = scmp.ne.s32.totalorder %s139, %s140
      %p151 = scmp.eq.s32.totalorder %s21, 0
      %p152 = por %p150, %p151
      %p153 = scmp.ne.s32.totalorder %s139, %s140
      %p154 = scmp.eq.s32.totalorder %s22, 1
      %p155 = por %p153, %p154
      %p157 = scmp.ne.s32.totalorder %s140, %s156
      %p158 = scmp.eq.s32.totalorder %s22, 0
      %p159 = por %p157, %p158
      %p160 = scmp.le.s32.totalorder 1, %s16
      %p161 = scmp.lt.s32.totalorder %s16, 3
      %p162 = pnand %p160, %p161
      %p163 = pneg %p162
      // Predicated region
      $region9: #{tpu_custom_call.1} parent=5 // pred_check
        _
      $region10: #{tpu_custom_call.1} parent=5 // pred_check_branch
        %165 = sbr.rel (%p162) target = $region12
      $region11: #{tpu_custom_call.1} parent=5 // pred_region
        %s166 = ssub.s32 %s16, 1
        // Predicated region
        $region13: #{tpu_custom_call.1} parent=11 // pred_check
          %p167 = pneg %p63
        $region14: #{tpu_custom_call.1} parent=11 // pred_check_branch
          %169 = sbr.rel (%p167) target = $region16
        $region15: #{tpu_custom_call.1} parent=11 // pred_region
          %s171 = ssub.s32 384, 384
          %172 = vsyncadd [#allocation3], %s171
          %s173 = sshll.u32 [#allocation2], 4
          %s174 = int_to_ptr.vmem [resolvable:$true] %s173
          %179 = dma.hbm_to_vmem [thread:$0]  %s1, 384, %s174, [#allocation3], 128, 128, 8
        $region16: #{tpu_custom_call.1} parent=11 // pred_fallthru
          _
        // Predicated region
        $region17: #{tpu_custom_call.1} parent=11 // pred_check
          %p180 = pneg %p84
        $region18: #{tpu_custom_call.1} parent=11 // pred_check_branch
          %182 = sbr.rel (%p180) target = $region20
        $region19: #{tpu_custom_call.1} parent=11 // pred_region
          _
        $region20: #{tpu_custom_call.1} parent=11 // pred_fallthru
          _
        // Predicated region
        $region21: #{tpu_custom_call.1} parent=11 // pred_check
          %p183 = pneg %p105
        $region22: #{tpu_custom_call.1} parent=11 // pred_check_branch
          %185 = sbr.rel (%p183) target = $region24
        $region23: #{tpu_custom_call.1} parent=11 // pred_region
          %s187 = ssub.s32 384, 384
          %188 = vsyncadd [#allocation6], %s187
          %s189 = sshll.u32 [#allocation5], 4
          %s190 = int_to_ptr.vmem [resolvable:$true] %s189
          %195 = dma.hbm_to_vmem [thread:$0]  %s3, 384, %s190, [#allocation6], 128, 128, 8
        $region24: #{tpu_custom_call.1} parent=11 // pred_fallthru
          _
        // Predicated region
        $region25: #{tpu_custom_call.1} parent=11 // pred_check
          %p196 = pneg %p126
        $region26: #{tpu_custom_call.1} parent=11 // pred_check_branch
          %198 = sbr.rel (%p196) target = $region28
        $region27: #{tpu_custom_call.1} parent=11 // pred_region
          _
        $region28: #{tpu_custom_call.1} parent=11 // pred_fallthru
          _
      $region12: #{tpu_custom_call.1} parent=5 // pred_fallthru
        _
      %p199 = scmp.lt.s32.totalorder %s16, 2
      // Predicated region
      $region29: #{tpu_custom_call.1} parent=5 // pred_check
        %p200 = pneg %p199
      $region30: #{tpu_custom_call.1} parent=5 // pred_check_branch
        %202 = sbr.rel (%p200) target = $region32
      $region31: #{tpu_custom_call.1} parent=5 // pred_region
        // Predicated region
        $region33: #{tpu_custom_call.1} parent=31 // pred_check
          %p203 = pneg %p36
        $region34: #{tpu_custom_call.1} parent=31 // pred_check_branch
          %205 = sbr.rel (%p203) target = $region36
        $region35: #{tpu_custom_call.1} parent=31 // pred_region
          %p206 = scmp.lt.s32.totalorder %s16, 1
          %s207 = scalar_select %p206, %s16, 1
          %s208 = smul.addr %s207, 3
          %s209 = smul.addr %s208, 8
          %s210 = scalar_lea.vmem %s0, %s209
        $region36: #{tpu_custom_call.1} parent=31 // pred_fallthru
          _
      $region32: #{tpu_custom_call.1} parent=5 // pred_fallthru
        _
      %p211 = scmp.le.s32.totalorder 1, %s16
      %p212 = scmp.lt.s32.totalorder %s16, 3
      %p213 = pnand %p211, %p212
      %p214 = pneg %p213
      // Predicated region
      $region37: #{tpu_custom_call.1} parent=5 // pred_check
        _
      $region38: #{tpu_custom_call.1} parent=5 // pred_check_branch
        %216 = sbr.rel (%p213) target = $region40
      $region39: #{tpu_custom_call.1} parent=5 // pred_region
        %s217 = ssub.s32 %s16, 1
        // Predicated region
        $region41: #{tpu_custom_call.1} parent=39 // pred_check
          %p218 = pneg %p63
        $region42: #{tpu_custom_call.1} parent=39 // pred_check_branch
          %220 = sbr.rel (%p218) target = $region44
        $region43: #{tpu_custom_call.1} parent=39 // pred_region
          %221 = dma.done [#allocation3], 384
        $region44: #{tpu_custom_call.1} parent=39 // pred_fallthru
          _
        // Predicated region
        $region45: #{tpu_custom_call.1} parent=39 // pred_check
          %p222 = pneg %p105
        $region46: #{tpu_custom_call.1} parent=39 // pred_check_branch
          %224 = sbr.rel (%p222) target = $region48
        $region47: #{tpu_custom_call.1} parent=39 // pred_region
          %225 = dma.done [#allocation6], 384
        $region48: #{tpu_custom_call.1} parent=39 // pred_fallthru
          _
        %p226 = scmp.lt.s32.totalorder %s21, 1
        %s227 = scalar_select %p226, %s21, 1
        %s228 = smul.addr %s227, 3
        %s229 = smul.addr %s228, 8
        %s230 = scalar_lea.vmem %s0, %s229
        %p231 = pneg %p42
        %p232 = pneg %p39
        %p233 = pneg %p63
        %p234 = pneg %p60
        %p235 = pneg %p84
        %p236 = pneg %p81
        %p237 = pneg %p105
        %p238 = pneg %p102
        %p239 = pneg %p126
        %p240 = pneg %p123
        %p241 = pneg %p152
        %p242 = pneg %p149
        %s243 = sand.u32 %s139, 1
        %s244 = scalar_lea.sflag [#allocation4], %s243
        %s245 = sand.u32 %s139, 1
        %s246 = smul.addr %s245, 24
        %s247 = scalar_lea.vmem [#allocation7], %s246
        %p248 = scmp.lt.s32.totalorder %s21, 1
        %s249 = scalar_select %p248, %s21, 1
        %s250 = smul.addr %s249, 3
        %s251 = smul.addr %s250, 8
        %s252 = scalar_lea.vmem %s0, %s251
        %v253 = vlaneseq
        %v254 = vshrl.u32 %v253, 7
        %v255 = vadd.s32 %v254, 8
        %v256 = vadd.s32 %v254, 16
        %v257 = vadd.s32 %v254, 24
        %v258 = vadd.s32 %v254, 32
        %v259 = vadd.s32 %v254, 40
        %v260 = vadd.s32 %v254, 48
        %v261 = vlaneseq
        %v262 = vand.u32 %v261, 127
        %v263 = vmul.u32 %v262, 7
        %vm264 = vcmp.ge.s32.totalorder %v254, %v263
        %vm265 = vcmp.ge.s32.totalorder %v255, %v263
        %vm266 = vcmp.ge.s32.totalorder %v256, %v263
        %vm267 = vcmp.ge.s32.totalorder %v257, %v263
        %vm268 = vcmp.ge.s32.totalorder %v258, %v263
        %vm269 = vcmp.ge.s32.totalorder %v259, %v263
        %vm270 = vcmp.ge.s32.totalorder %v260, %v263
        %v271 = vadd.s32 %v262, 1
        %v272 = vmul.u32 %v271, 7
        %vm273 = vcmp.lt.s32.totalorder %v254, %v272
        %vm274 = vcmp.lt.s32.totalorder %v255, %v272
        %vm275 = vcmp.lt.s32.totalorder %v256, %v272
        %vm276 = vcmp.lt.s32.totalorder %v257, %v272
        %vm277 = vcmp.lt.s32.totalorder %v258, %v272
        %vm278 = vcmp.lt.s32.totalorder %v259, %v272
        %vm279 = vcmp.lt.s32.totalorder %v260, %v272
        %vm280 = vmand %vm264, %vm273
        %vm281 = vmand %vm265, %vm274
        %vm282 = vmand %vm266, %vm275
        %vm283 = vmand %vm267, %vm276
        %vm284 = vmand %vm268, %vm277
        %vm285 = vmand %vm269, %vm278
        %vm286 = vmand %vm270, %vm279
        %v287 = vsel %vm280, 1, 0
        %v288 = vsel %vm281, 1, 0
        %v289 = vsel %vm282, 1, 0
        %v290 = vsel %vm283, 1, 0
        %v291 = vsel %vm284, 1, 0
        %v292 = vsel %vm285, 1, 0
        %v293 = vsel %vm286, 1, 0
        %v294 = vcvt.s32.f32 %v287
        %v295 = vcvt.s32.f32 %v288
        %v296 = vcvt.s32.f32 %v289
        %v297 = vcvt.s32.f32 %v290
        %v298 = vcvt.s32.f32 %v291
        %v299 = vcvt.s32.f32 %v292
        %v300 = vcvt.s32.f32 %v293
        %v301 = vmul.f32 %v294, 0.14285715
        %v302 = vmul.f32 %v295, 0.14285715
        %v303 = vmul.f32 %v296, 0.14285715
        %v304 = vmul.f32 %v297, 0.14285715
        %v305 = vmul.f32 %v298, 0.14285715
        %v306 = vmul.f32 %v299, 0.14285715
        %v307 = vmul.f32 %v300, 0.14285715
        %v308 = vmul.u32 %v254, 7
        %vm309 = vcmp.ge.s32.totalorder %v262, %v308
        %v310 = vadd.s32 %v254, 1
        %v311 = vmul.u32 %v310, 7
        %vm312 = vcmp.lt.s32.totalorder %v262, %v311
        %vm313 = vmand %vm309, %vm312
        %v314 = vsel %vm313, 1, 0
        %v315 = vcvt.s32.f32 %v314
        %v316 = vld [vmem:[#allocation2] sm:$0xff]
        %v317 = vld [vmem:[#allocation2 + $0x8] sm:$0xff]
        %v318 = vld [vmem:[#allocation2 + $0x10] sm:$0xff]
        %v319 = vld [vmem:[%s2] sm:$0xff]
        %v320 = vld [vmem:[%s2 + $0x8] sm:$0xff]
        %v321 = vld [vmem:[%s2 + $0x10] sm:$0xff]
        %v322 = vld [vmem:[#allocation5] sm:$0xff]
        %v323 = vld [vmem:[#allocation5 + $0x8] sm:$0xff]
        %v324 = vld [vmem:[#allocation5 + $0x10] sm:$0xff]
        %v325 = vld [vmem:[%s4] sm:$0xff]
        %v326 = vld [vmem:[%s4 + $0x8] sm:$0xff]
        %v327 = vld [vmem:[%s4 + $0x10] sm:$0xff]
        %v328 = vld [vmem:[%s252] sm:$0xff]
        %v329 = vld [vmem:[%s252 + $0x8] sm:$0xff]
        %v330 = vld [vmem:[%s252 + $0x10] sm:$0xff]
        %vm331 = vcmask 400384
        %v332 = vsel %vm331, %v328, 0.0
        %333 = vadd.xlane.f32.xlu0 %v332
        %v334 = vpop.xlane.xlu0 %333
        %v335 = vsel %vm331, %v329, 0.0
        %336 = vadd.xlane.f32.xlu0 %v335
        %v337 = vpop.xlane.xlu0 %336
        %v338 = vsel %vm331, %v330, 0.0
        %339 = vadd.xlane.f32.xlu0 %v338
        %v340 = vpop.xlane.xlu0 %339
        %v341 = vrcp.pop 49.0
        %v342 = vmul.f32 %v334, %v341
        %v343 = vmul.f32 %v337, %v341
        %v344 = vmul.f32 %v340, %v341
        %vm345 = vcmask 195584
        %v347 = vsel %vm345, %v316, 0
        %v350 = vsel %vm345, %v317, 0
        %v353 = vsel %vm345, %v318, 0
        %355 = vmatprep.subr.mxu0 0.0
        %356 = vmatpush1.msra.mxu0 %v342
        %357 = vmatprep.subr.mxu0 0.0
        %358 = vmatpush1.msra.mxu0 %v343
        %359 = vmatprep.subr.mxu0 0.0
        %360 = vmatpush1.msra.mxu0 %v344
        %361 = vmatprep.subr.mxu0 0.0
        %362 = vmatpush1.msra.mxu0 0.0
        %363 = vmatprep.subr.mxu0 0.0
        %364 = vmatpush1.msra.mxu0 0.0
        %365 = vmatprep.subr.mxu0 0.0
        %366 = vmatpush1.msra.mxu0 0.0
        %367 = vmatprep.subr.mxu0 0.0
        %368 = vmatpush1.msra.mxu0 0.0
        %369 = vmatprep.subr.mxu0 0.0
        %370 = vmatpush1.msra.mxu0 0.0
        %371 = vmatprep.subr.mxu0 0.0
        %372 = vmatpush1.msra.mxu0 0.0
        %373 = vmatprep.subr.mxu0 0.0
        %374 = vmatpush1.msra.mxu0 0.0
        %375 = vmatprep.subr.mxu0 0.0
        %376 = vmatpush1.msra.mxu0 0.0
        %377 = vmatprep.subr.mxu0 0.0
        %378 = vmatpush1.msra.mxu0 0.0
        %379 = vmatprep.subr.mxu0 0.0
        %380 = vmatpush1.msra.mxu0 0.0
        %381 = vmatprep.subr.mxu0 0.0
        %382 = vmatpush1.msra.mxu0 0.0
        %383 = vmatprep.subr.mxu0 0.0
        %384 = vmatpush1.msra.mxu0 0.0
        %385 = vmatprep.subr.mxu0 0.0
        %386 = vmatpush1.msra.mxu0 0.0
        %387 = vmatprep.subr.mxu0 0.0
        %388 = vmatpush1.msra.mxu0 0.0
        %389 = vmatprep.subr.mxu0 0.0
        %390 = vmatpush1.msra.mxu0 0.0
        %391 = vmatprep.subr.mxu0 0.0
        %392 = vmatpush1.msra.mxu0 0.0
        %393 = vmatprep.subr.mxu0 0.0
        %394 = vmatpush1.msra.mxu0 0.0
        %395 = vmatprep.subr.mxu0 0.0
        %396 = vmatpush1.msra.mxu0 0.0
        %397 = vmatprep.subr.mxu0 0.0
        %398 = vmatpush1.msra.mxu0 0.0
        %399 = vmatprep.subr.mxu0 0.0
        %400 = vmatpush1.msra.mxu0 0.0
        %401 = vmatprep.subr.mxu0 0.0
        %402 = vmatpush1.msra.mxu0 0.0
        %403 = vmatprep.subr.mxu0 0.0
        %404 = vmatpush1.msra.mxu0 0.0
        %405 = vmatprep.subr.mxu0 0.0
        %406 = vmatpush1.msra.mxu0 0.0
        %407 = vmatprep.subr.mxu0 0.0
        %408 = vmatpush1.msra.mxu0 0.0
        %409 = vmatprep.subr.mxu0 0.0
        %410 = vmatpush1.msra.mxu0 0.0
        %411 = vmatprep.subr.mxu0 0.0
        %412 = vmatpush1.msra.mxu0 0.0
        %413 = vmatprep.subr.mxu0 0.0
        %414 = vmatpush1.msra.mxu0 0.0
        %415 = vmatprep.subr.mxu0 0.0
        %416 = vmatpush1.msra.mxu0 0.0
        %417 = vmatprep.subr.mxu0 0.0
        %418 = vmatpush1.msra.mxu0 0.0
        %419 = vmatprep.mubr.f32.mxu0 0.0
        %420 = vmatmul.mubr.f32.gmra.mrb[0].mxu0 %v347
        %v421 = vpop.f32.mrb[0].mxu0
        %v422 = vadd.f32 %v319, %v421
        %v423 = vpop.f32.mrb[0].mxu0
        %424 = vmatprep.mubr.f32.mxu0 0.0
        %425 = vmatmul.mubr.f32.gmra.mrb[0].mxu0 %v350
        %v426 = vpop.f32.mrb[0].mxu0
        %v427 = vadd.f32 %v320, %v426
        %v428 = vpop.f32.mrb[0].mxu0
        %429 = vmatprep.mubr.f32.mxu0 0.0
        %430 = vmatmul.mubr.f32.gmra.mrb[0].mxu0 %v353
        %v431 = vpop.f32.mrb[0].mxu0
        %v432 = vadd.f32 %v321, %v431
        %v433 = vpop.f32.mrb[0].mxu0
        %434 = vdwg.mxu0
        %v435 = vmax.f32 %v422, 0.0
        %v436 = vmax.f32 %v427, 0.0
        %v437 = vmax.f32 %v432, 0.0
        %v439 = vsel %vm345, %v322, 0
        %v442 = vsel %vm345, %v323, 0
        %v445 = vsel %vm345, %v324, 0
        %447 = vmatprep.subr.mxu0 0.0
        %448 = vmatpush1.msra.mxu0 %v435
        %449 = vmatprep.subr.mxu0 0.0
        %450 = vmatpush1.msra.mxu0 %v436
        %451 = vmatprep.subr.mxu0 0.0
        %452 = vmatpush1.msra.mxu0 %v437
        %453 = vmatprep.subr.mxu0 0.0
        %454 = vmatpush1.msra.mxu0 0.0
        %455 = vmatprep.subr.mxu0 0.0
        %456 = vmatpush1.msra.mxu0 0.0
        %457 = vmatprep.subr.mxu0 0.0
        %458 = vmatpush1.msra.mxu0 0.0
        %459 = vmatprep.subr.mxu0 0.0
        %460 = vmatpush1.msra.mxu0 0.0
        %461 = vmatprep.subr.mxu0 0.0
        %462 = vmatpush1.msra.mxu0 0.0
        %463 = vmatprep.subr.mxu0 0.0
        %464 = vmatpush1.msra.mxu0 0.0
        %465 = vmatprep.subr.mxu0 0.0
        %466 = vmatpush1.msra.mxu0 0.0
        %467 = vmatprep.subr.mxu0 0.0
        %468 = vmatpush1.msra.mxu0 0.0
        %469 = vmatprep.subr.mxu0 0.0
        %470 = vmatpush1.msra.mxu0 0.0
        %471 = vmatprep.subr.mxu0 0.0
        %472 = vmatpush1.msra.mxu0 0.0
        %473 = vmatprep.subr.mxu0 0.0
        %474 = vmatpush1.msra.mxu0 0.0
        %475 = vmatprep.subr.mxu0 0.0
        %476 = vmatpush1.msra.mxu0 0.0
        %477 = vmatprep.subr.mxu0 0.0
        %478 = vmatpush1.msra.mxu0 0.0
        %479 = vmatprep.subr.mxu0 0.0
        %480 = vmatpush1.msra.mxu0 0.0
        %481 = vmatprep.subr.mxu0 0.0
        %482 = vmatpush1.msra.mxu0 0.0
        %483 = vmatprep.subr.mxu0 0.0
        %484 = vmatpush1.msra.mxu0 0.0
        %485 = vmatprep.subr.mxu0 0.0
        %486 = vmatpush1.msra.mxu0 0.0
        %487 = vmatprep.subr.mxu0 0.0
        %488 = vmatpush1.msra.mxu0 0.0
        %489 = vmatprep.subr.mxu0 0.0
        %490 = vmatpush1.msra.mxu0 0.0
        %491 = vmatprep.subr.mxu0 0.0
        %492 = vmatpush1.msra.mxu0 0.0
        %493 = vmatprep.subr.mxu0 0.0
        %494 = vmatpush1.msra.mxu0 0.0
        %495 = vmatprep.subr.mxu0 0.0
        %496 = vmatpush1.msra.mxu0 0.0
        %497 = vmatprep.subr.mxu0 0.0
        %498 = vmatpush1.msra.mxu0 0.0
        %499 = vmatprep.subr.mxu0 0.0
        %500 = vmatpush1.msra.mxu0 0.0
        %501 = vmatprep.subr.mxu0 0.0
        %502 = vmatpush1.msra.mxu0 0.0
        %503 = vmatprep.subr.mxu0 0.0
        %504 = vmatpush1.msra.mxu0 0.0
        %505 = vmatprep.subr.mxu0 0.0
        %506 = vmatpush1.msra.mxu0 0.0
        %507 = vmatprep.subr.mxu0 0.0
        %508 = vmatpush1.msra.mxu0 0.0
        %509 = vmatprep.subr.mxu0 0.0
        %510 = vmatpush1.msra.mxu0 0.0
        %511 = vmatprep.mubr.f32.mxu0 0.0
        %512 = vmatmul.mubr.f32.gmra.mrb[0].mxu0 %v439
        %v513 = vpop.f32.mrb[0].mxu0
        %v514 = vadd.f32 %v325, %v513
        %v515 = vpop.f32.mrb[0].mxu0
        %516 = vmatprep.mubr.f32.mxu0 0.0
        %517 = vmatmul.mubr.f32.gmra.mrb[0].mxu0 %v442
        %v518 = vpop.f32.mrb[0].mxu0
        %v519 = vadd.f32 %v326, %v518
        %v520 = vpop.f32.mrb[0].mxu0
        %521 = vmatprep.mubr.f32.mxu0 0.0
        %522 = vmatmul.mubr.f32.gmra.mrb[0].mxu0 %v445
        %v523 = vpop.f32.mrb[0].mxu0
        %v524 = vadd.f32 %v327, %v523
        %v525 = vpop.f32.mrb[0].mxu0
        %526 = vdwg.mxu0
        %v527 = vxor.u32 %v514, 2147483648
        %v528 = vxor.u32 %v519, 2147483648
        %v529 = vxor.u32 %v524, 2147483648
        %v530 = vmul.f32 %v527, 1.442695
        %v531 = vpow.pop %v530
        %v532 = vmul.f32 %v528, 1.442695
        %v533 = vpow.pop %v532
        %v534 = vmul.f32 %v529, 1.442695
        %v535 = vpow.pop %v534
        %v536 = vadd.f32 %v531, 1.0
        %v537 = vadd.f32 %v533, 1.0
        %v538 = vadd.f32 %v535, 1.0
        %v539 = vrcp.pop %v536
        %v540 = vmul.f32 1.0, %v539
        %v541 = vrcp.pop %v537
        %v542 = vmul.f32 1.0, %v541
        %v543 = vrcp.pop %v538
        %v544 = vmul.f32 1.0, %v543
        %546 = vset.pattern.permute.xlu0 0
        %547 = vperm.xlu0 %546, %v540
        %v548 = vpop.permute.xlu0 %547
        %551 = vset.pattern.permute.xlu0 0
        %552 = vperm.xlu0 %551, %v542
        %v553 = vpop.permute.xlu0 %552
        %556 = vset.pattern.permute.xlu0 0
        %557 = vperm.xlu0 %556, %v544
        %v558 = vpop.permute.xlu0 %557
        %v560 = vmul.f32 %v328, %v548
        %v561 = vmul.f32 %v329, %v553
        %v562 = vmul.f32 %v330, %v558
        %v564 = vsel %vm331, %v560, 0
        %v567 = vsel %vm331, %v561, 0
        %v570 = vsel %vm331, %v562, 0
        %vm572 = vcmask 1040384
        %v574 = vsel %vm572, %v307, 0
        %576 = vmatprep.subr.mxu0 0.0
        %577 = vmatpush1.msra.mxu0 %v301
        %578 = vmatprep.subr.mxu0 0.0
        %579 = vmatpush1.msra.mxu0 %v302
        %580 = vmatprep.subr.mxu0 0.0
        %581 = vmatpush1.msra.mxu0 %v303
        %582 = vmatprep.subr.mxu0 0.0
        %583 = vmatpush1.msra.mxu0 %v304
        %584 = vmatprep.subr.mxu0 0.0
        %585 = vmatpush1.msra.mxu0 %v305
        %586 = vmatprep.subr.mxu0 0.0
        %587 = vmatpush1.msra.mxu0 %v306
        %588 = vmatprep.subr.mxu0 0.0
        %589 = vmatpush1.msra.mxu0 %v574
        %590 = vmatprep.subr.mxu0 0.0
        %591 = vmatpush1.msra.mxu0 0.0
        %592 = vmatprep.subr.mxu0 0.0
        %593 = vmatpush1.msra.mxu0 0.0
        %594 = vmatprep.subr.mxu0 0.0
        %595 = vmatpush1.msra.mxu0 0.0
        %596 = vmatprep.subr.mxu0 0.0
        %597 = vmatpush1.msra.mxu0 0.0
        %598 = vmatprep.subr.mxu0 0.0
        %599 = vmatpush1.msra.mxu0 0.0
        %600 = vmatprep.subr.mxu0 0.0
        %601 = vmatpush1.msra.mxu0 0.0
        %602 = vmatprep.subr.mxu0 0.0
        %603 = vmatpush1.msra.mxu0 0.0
        %604 = vmatprep.subr.mxu0 0.0
        %605 = vmatpush1.msra.mxu0 0.0
        %606 = vmatprep.subr.mxu0 0.0
        %607 = vmatpush1.msra.mxu0 0.0
        %608 = vmatprep.subr.mxu0 0.0
        %609 = vmatpush1.msra.mxu0 0.0
        %610 = vmatprep.subr.mxu0 0.0
        %611 = vmatpush1.msra.mxu0 0.0
        %612 = vmatprep.subr.mxu0 0.0
        %613 = vmatpush1.msra.mxu0 0.0
        %614 = vmatprep.subr.mxu0 0.0
        %615 = vmatpush1.msra.mxu0 0.0
        %616 = vmatprep.subr.mxu0 0.0
        %617 = vmatpush1.msra.mxu0 0.0
        %618 = vmatprep.subr.mxu0 0.0
        %619 = vmatpush1.msra.mxu0 0.0
        %620 = vmatprep.subr.mxu0 0.0
        %621 = vmatpush1.msra.mxu0 0.0
        %622 = vmatprep.subr.mxu0 0.0
        %623 = vmatpush1.msra.mxu0 0.0
        %624 = vmatprep.subr.mxu0 0.0
        %625 = vmatpush1.msra.mxu0 0.0
        %626 = vmatprep.subr.mxu0 0.0
        %627 = vmatpush1.msra.mxu0 0.0
        %628 = vmatprep.subr.mxu0 0.0
        %629 = vmatpush1.msra.mxu0 0.0
        %630 = vmatprep.subr.mxu0 0.0
        %631 = vmatpush1.msra.mxu0 0.0
        %632 = vmatprep.subr.mxu0 0.0
        %633 = vmatpush1.msra.mxu0 0.0
        %634 = vmatprep.subr.mxu0 0.0
        %635 = vmatpush1.msra.mxu0 0.0
        %636 = vmatprep.subr.mxu0 0.0
        %637 = vmatpush1.msra.mxu0 0.0
        %638 = vmatprep.subr.mxu0 0.0
        %639 = vmatpush1.msra.mxu0 0.0
        %640 = vmatprep.mubr.f32.mxu0 0.0
        %641 = vmatmul.mubr.f32.gmra.mrb[0].mxu0 %v564
        %v642 = vpop.f32.mrb[0].mxu0
        %v643 = vadd.f32 0.0, %v642
        %v644 = vpop.f32.mrb[0].mxu0
        %645 = vmatprep.mubr.f32.mxu0 0.0
        %646 = vmatmul.mubr.f32.gmra.mrb[0].mxu0 %v567
        %v647 = vpop.f32.mrb[0].mxu0
        %v648 = vadd.f32 0.0, %v647
        %v649 = vpop.f32.mrb[0].mxu0
        %650 = vmatprep.mubr.f32.mxu0 0.0
        %651 = vmatmul.mubr.f32.gmra.mrb[0].mxu0 %v570
        %v652 = vpop.f32.mrb[0].mxu0
        %v653 = vadd.f32 0.0, %v652
        %v654 = vpop.f32.mrb[0].mxu0
        %655 = vdwg.mxu0
        %v656 = vxor.u32 %v643, 2147483648
        %v657 = vxor.u32 %v648, 2147483648
        %v658 = vxor.u32 %v653, 2147483648
        %v659 = vmul.f32 %v656, 1.442695
        %v660 = vpow.pop %v659
        %v661 = vmul.f32 %v657, 1.442695
        %v662 = vpow.pop %v661
        %v663 = vmul.f32 %v658, 1.442695
        %v664 = vpow.pop %v663
        %v665 = vadd.f32 %v660, 1.0
        %v666 = vadd.f32 %v662, 1.0
        %v667 = vadd.f32 %v664, 1.0
        %v668 = vrcp.pop %v665
        %v669 = vmul.f32 1.0, %v668
        %v670 = vrcp.pop %v666
        %v671 = vmul.f32 1.0, %v670
        %v672 = vrcp.pop %v667
        %v673 = vmul.f32 1.0, %v672
        %vm674 = vcmask 56320
        %v676 = vsel %vm674, %v669, 0
        %v679 = vsel %vm674, %v671, 0
        %v682 = vsel %vm674, %v673, 0
        %vm684 = vcmask 1046528
        %v686 = vsel %vm684, %v315, 0
        %688 = vmatprep.subr.mxu0 0.0
        %689 = vmatpush1.msra.mxu0 %v686
        %690 = vmatprep.subr.mxu0 0.0
        %691 = vmatpush1.msra.mxu0 0.0
        %692 = vmatprep.subr.mxu0 0.0
        %693 = vmatpush1.msra.mxu0 0.0
        %694 = vmatprep.subr.mxu0 0.0
        %695 = vmatpush1.msra.mxu0 0.0
        %696 = vmatprep.subr.mxu0 0.0
        %697 = vmatpush1.msra.mxu0 0.0
        %698 = vmatprep.subr.mxu0 0.0
        %699 = vmatpush1.msra.mxu0 0.0
        %700 = vmatprep.subr.mxu0 0.0
        %701 = vmatpush1.msra.mxu0 0.0
        %702 = vmatprep.subr.mxu0 0.0
        %703 = vmatpush1.msra.mxu0 0.0
        %704 = vmatprep.subr.mxu0 0.0
        %705 = vmatpush1.msra.mxu0 0.0
        %706 = vmatprep.subr.mxu0 0.0
        %707 = vmatpush1.msra.mxu0 0.0
        %708 = vmatprep.subr.mxu0 0.0
        %709 = vmatpush1.msra.mxu0 0.0
        %710 = vmatprep.subr.mxu0 0.0
        %711 = vmatpush1.msra.mxu0 0.0
        %712 = vmatprep.subr.mxu0 0.0
        %713 = vmatpush1.msra.mxu0 0.0
        %714 = vmatprep.subr.mxu0 0.0
        %715 = vmatpush1.msra.mxu0 0.0
        %716 = vmatprep.subr.mxu0 0.0
        %717 = vmatpush1.msra.mxu0 0.0
        %718 = vmatprep.subr.mxu0 0.0
        %719 = vmatpush1.msra.mxu0 0.0
        %720 = vmatprep.subr.mxu0 0.0
        %721 = vmatpush1.msra.mxu0 0.0
        %722 = vmatprep.subr.mxu0 0.0
        %723 = vmatpush1.msra.mxu0 0.0
        %724 = vmatprep.subr.mxu0 0.0
        %725 = vmatpush1.msra.mxu0 0.0
        %726 = vmatprep.subr.mxu0 0.0
        %727 = vmatpush1.msra.mxu0 0.0
        %728 = vmatprep.subr.mxu0 0.0
        %729 = vmatpush1.msra.mxu0 0.0
        %730 = vmatprep.subr.mxu0 0.0
        %731 = vmatpush1.msra.mxu0 0.0
        %732 = vmatprep.subr.mxu0 0.0
        %733 = vmatpush1.msra.mxu0 0.0
        %734 = vmatprep.subr.mxu0 0.0
        %735 = vmatpush1.msra.mxu0 0.0
        %736 = vmatprep.subr.mxu0 0.0
        %737 = vmatpush1.msra.mxu0 0.0
        %738 = vmatprep.subr.mxu0 0.0
        %739 = vmatpush1.msra.mxu0 0.0
        %740 = vmatprep.subr.mxu0 0.0
        %741 = vmatpush1.msra.mxu0 0.0
        %742 = vmatprep.subr.mxu0 0.0
        %743 = vmatpush1.msra.mxu0 0.0
        %744 = vmatprep.subr.mxu0 0.0
        %745 = vmatpush1.msra.mxu0 0.0
        %746 = vmatprep.subr.mxu0 0.0
        %747 = vmatpush1.msra.mxu0 0.0
        %748 = vmatprep.subr.mxu0 0.0
        %749 = vmatpush1.msra.mxu0 0.0
        %750 = vmatprep.subr.mxu0 0.0
        %751 = vmatpush1.msra.mxu0 0.0
        %752 = vmatprep.mubr.f32.mxu0 0.0
        %753 = vmatmul.mubr.f32.gmra.mrb[0].mxu0 %v676
        %v754 = vpop.f32.mrb[0].mxu0
        %v755 = vadd.f32 0.0, %v754
        %v756 = vpop.f32.mrb[0].mxu0
        %757 = vmatprep.mubr.f32.mxu0 0.0
        %758 = vmatmul.mubr.f32.gmra.mrb[0].mxu0 %v679
        %v759 = vpop.f32.mrb[0].mxu0
        %v760 = vadd.f32 0.0, %v759
        %v761 = vpop.f32.mrb[0].mxu0
        %762 = vmatprep.mubr.f32.mxu0 0.0
        %763 = vmatmul.mubr.f32.gmra.mrb[0].mxu0 %v682
        %v764 = vpop.f32.mrb[0].mxu0
        %v765 = vadd.f32 0.0, %v764
        %v766 = vpop.f32.mrb[0].mxu0
        %767 = vdwg.mxu0
        %v768 = vmul.f32 %v755, %v560
        %v769 = vmul.f32 %v760, %v561
        %v770 = vmul.f32 %v765, %v562
        %771 = vst.msk [vmem:[%s247] sm:$0xff] %vm331, %v768
        %772 = vst.msk [vmem:[%s247 + $0x8] sm:$0xff] %vm331, %v769
        %773 = vst.msk [vmem:[%s247 + $0x10] sm:$0xff] %vm331, %v770
        %s774 = sand.u32 %s139, 1
        %s775 = scalar_lea.sflag [#allocation4], %s774
        %s776 = sand.u32 %s139, 1
        %s777 = smul.addr %s776, 24
        %s778 = scalar_lea.vmem [#allocation7], %s777
        // Predicated region
        $region49: #{tpu_custom_call.1} parent=39 // pred_check
          %p779 = pneg %p149
        $region50: #{tpu_custom_call.1} parent=39 // pred_check_branch
          %781 = sbr.rel (%p779) target = $region52
        $region51: #{tpu_custom_call.1} parent=39 // pred_region
          %s783 = ssub.s32 384, 384
          %784 = vsyncadd %s775, %s783
          %s785 = smul.addr %s21, 3
          %s786 = smul.addr %s785, 128
          %s787 = scalar_lea.hbm %s5, %s786
          %s788 = sshll.u32 %s778, 4
          %s789 = int_to_ptr.vmem [resolvable:$true] %s788
          %794 = dma.vmem_to_hbm [thread:$0]  %s789, 384, %s787, %s775, 128, 128, 8
        $region52: #{tpu_custom_call.1} parent=39 // pred_fallthru
          _
      $region40: #{tpu_custom_call.1} parent=5 // pred_fallthru
        _
      %p795 = scmp.le.s32.totalorder 2, %s16
      // Predicated region
      $region53: #{tpu_custom_call.1} parent=5 // pred_check
        %p796 = pneg %p795
      $region54: #{tpu_custom_call.1} parent=5 // pred_check_branch
        %798 = sbr.rel (%p796) target = $region56
      $region55: #{tpu_custom_call.1} parent=5 // pred_region
        %s799 = ssub.s32 %s16, 2
        // Predicated region
        $region57: #{tpu_custom_call.1} parent=55 // pred_check
          %p800 = pneg %p155
        $region58: #{tpu_custom_call.1} parent=55 // pred_check_branch
          %802 = sbr.rel (%p800) target = $region60
        $region59: #{tpu_custom_call.1} parent=55 // pred_region
          %s803 = sand.u32 %s140, 1
          %s804 = scalar_lea.sflag [#allocation4], %s803
          %s805 = sand.u32 %s140, 1
          %s806 = smul.addr %s805, 24
          %s807 = scalar_lea.vmem [#allocation7], %s806
          %808 = dma.done %s804, 384
        $region60: #{tpu_custom_call.1} parent=55 // pred_fallthru
          _
      $region56: #{tpu_custom_call.1} parent=5 // pred_fallthru
        _
    $region6: #{tpu_custom_call.1} parent=1 // loop_footer
      %s20 = sadd.s32 1, %s16
    $region7: #{tpu_custom_call.1} parent=1 // loop_footer_branch
      %15 = sbr.rel target = $region3
    $region8: #{tpu_custom_call.1} parent=1 // loop_exit
      _
    %809 = vsyncpa [#allocation3], 1
    %s810 = scalar_lea.sflag [#allocation3], 1
    %811 = vsyncpa %s810, 1
    %812 = vsyncpa [#allocation6], 1
    %813 = vsyncpa [#allocation4], 1
    %s814 = scalar_lea.sflag [#allocation4], 1
    %815 = vsyncpa %s814, 1

</llo_original>
